<compile_context>
chip_gen: v7x
topology: tpu7x:2x2x1
jax: 0.10.0
libtpu: 0.0.40
codegen_flags: <defaults>
</compile_context>

<pallas_src>
import math

import jax
import jax.numpy as jnp
from jax import lax
from jax.experimental import pallas as pl
from jax.experimental.pallas import tpu as pltpu

_VMEM_LIMIT = 24 * 1024 * 1024   # v7x has 64 MiB/TC (32 MiB scoped default); kernel needs ~10 MiB
_NEG_SLOPE = 0.2                 # DGL GATConv default negative_slope
_NEG_BIG = -1e30                 # additive mask value (finite: avoids inf-inf NaNs)


def _round_up(x, m):
    return (x + m - 1) // m * m


def _pick_tile(n, target):
    # n is a multiple of 128; return the largest multiple of 128 <= target that divides n.
    t = max(128, min(target, n) // 128 * 128)
    while n % t:
        t -= 128
    return t


# --------------------------------------------------------------------------- #
# Kernel 1: per-layer projection  z = xW,  el^T = A_l_t z^T,  er^T = A_r_t z^T #
# --------------------------------------------------------------------------- #
def _proj_kernel(x_ref, w_ref, alt_ref, art_ref, z_ref, elt_ref, ert_ref):
    # x / w arrive pre-cast to bf16 from the wrapper; accumulate in f32 on MXU.
    z = jnp.dot(x_ref[...], w_ref[...], preferred_element_type=jnp.float32)  # (tm, HFp)
    z_ref[...] = z.astype(jnp.bfloat16)
    # Attention-score projections for ALL heads via block-diagonal matmuls.
    # Both emitted src/dst-major: lanes = nodes (lane-dense outputs).
    elt_ref[...] = lax.dot_general(alt_ref[...], z, (((1,), (1,)), ((), ())),
                                   preferred_element_type=jnp.float32)       # (H, tm)
    ert_ref[...] = lax.dot_general(art_ref[...], z, (((1,), (1,)), ((), ())),
                                   preferred_element_type=jnp.float32)       # (H, tm)


# --------------------------------------------------------------------------- #
# Kernel 2: attention + aggregation with online (flash-style) softmax          #
# --------------------------------------------------------------------------- #
def _make_attn_kernel(num_heads, f_out_p, apply_relu, acc_in_out):
    def kernel(nnz_ref, er_ref, elt_ref, z_ref, mask_ref, b_ref, expand_ref,
               o_ref, m_scr, l_scr, *rest):
        acc_ref = o_ref if acc_in_out else rest[0]
        i = pl.program_id(0)
        k = pl.program_id(1)
        n_src = pl.num_programs(1)

        @pl.when(k == 0)
        def _():
            m_scr[...] = jnp.full_like(m_scr, _NEG_BIG)
            l_scr[...] = jnp.zeros_like(l_scr)
            acc_ref[...] = jnp.zeros_like(acc_ref)

        # Skip all compute for (dst_tile, src_tile) pairs with no edges.
        @pl.when(nnz_ref[i * n_src + k] > 0)
        def _():
            er = er_ref[...]                         # (tm, H)  f32  (dst side, attn_r)
            elt = elt_ref[...]                       # (H, tn)  f32  (src side, attn_l)
            mask_b = mask_ref[...] > 0               # (tm, tn) bool (int8 adjacency)
            m_prev = m_scr[...]                      # (tm, H)
            l_prev = l_scr[...]                      # (tm, H)
            acc_prev = acc_ref[...]                  # (tm, HFp) f32

            m_news, rsums, pzs = [], [], []
            for h in range(num_heads):
                lo = h * f_out_p
                # e[v, u] = LeakyReLU(<z_v, a_r> + <z_u, a_l>)   (f32, VPU)
                e = er[:, h:h + 1] + elt[h:h + 1, :]             # (tm, tn)
                e = jnp.where(e > 0, e, _NEG_SLOPE * e)
                # additive mask BEFORE the max: running max stays tight over
                # valid edges; masked p underflows to exact 0 (no post-exp mul).
                e = jnp.where(mask_b, e, _NEG_BIG)
                m_new_h = jnp.maximum(m_prev[:, h:h + 1],
                                      jnp.max(e, axis=-1, keepdims=True))
                p = jnp.exp(e - m_new_h)                         # (tm, tn)
                m_news.append(m_new_h)
                rsums.append(jnp.sum(p, axis=-1, keepdims=True))
                pzs.append(jnp.dot(p.astype(jnp.bfloat16),
                                   z_ref[:, lo:lo + f_out_p],
                                   preferred_element_type=jnp.float32))

            cat = (lambda xs: xs[0] if num_heads == 1
                   else jnp.concatenate(xs, axis=-1))
            m_new = cat(m_news)                                  # (tm, H)
            corr = jnp.exp(m_prev - m_new)                       # one (tm, H) EUP op
            # lane-expand corr over each head's feature block with a tiny matmul
            corr_full = jnp.dot(corr, expand_ref[...],
                                preferred_element_type=jnp.float32)  # (tm, HFp)
            m_scr[...] = m_new                                   # full-width stores
            l_scr[...] = corr * l_prev + cat(rsums)
            acc_ref[...] = corr_full * acc_prev + cat(pzs)

        @pl.when(k == n_src - 1)
        def _():
            # deferred normalization, batched over heads, lane-expanded once
            inv = pl.reciprocal(jnp.maximum(l_scr[...], 1e-9), approx=True)  # (tm, H)
            inv_full = jnp.dot(inv, expand_ref[...],
                               preferred_element_type=jnp.float32)           # (tm, HFp)
            out = acc_ref[...] * inv_full + b_ref[...]
            if apply_relu:
                out = jnp.maximum(out, 0.0)
            o_ref[...] = out.astype(o_ref.dtype)

    return kernel


# --------------------------------------------------------------------------- #
# GAT layer wrapper                                                            #
# --------------------------------------------------------------------------- #
def _pack_gat_params(w, attn_l, attn_r, bias, num_heads, f_out, f_out_p):
    f_in = w.shape[0]
    h = num_heads
    pad = f_out_p - f_out
    w_p = jnp.pad(w.reshape(f_in, h, f_out),
                  ((0, 0), (0, 0), (0, pad))).reshape(f_in, h * f_out_p)
    w_p = w_p.astype(jnp.bfloat16)                    # pre-cast weights in wrapper
    al_p = jnp.pad(attn_l, ((0, 0), (0, pad)))        # (H, f_out_p)
    ar_p = jnp.pad(attn_r, ((0, 0), (0, pad)))
    eye = jnp.eye(h, dtype=jnp.float32)
    # (H, H*f_out_p) block-diagonal: row h nonzero only in head-h feature block
    a_l_t = (eye[:, :, None] * al_p[None, :, :]).reshape(h, h * f_out_p)
    a_r_t = (eye[:, :, None] * ar_p[None, :, :]).reshape(h, h * f_out_p)
    b_p = jnp.pad(bias.reshape(1, h, f_out),
                  ((0, 0), (0, 0), (0, pad))).reshape(1, h * f_out_p)
    # (H, H*f_out_p) "repeat" matrix: expand[h, h*f_out_p + j] = 1
    expand = jnp.repeat(eye, f_out_p, axis=1)
    return w_p, a_l_t, a_r_t, b_p, expand


def gat_layer(x, w, attn_l, attn_r, bias, mask_i8, *, num_heads, f_out,
              apply_relu, out_dtype, dst_tile=512, src_tile=1024):
    n_pad, f_in = x.shape
    h = num_heads
    step = 128 // math.gcd(h, 128)
    f_out_p = _round_up(f_out, step)          # lane-dense per-head feature width
    hfp = h * f_out_p                         # multiple of 128

    w_p, a_l_t, a_r_t, b_p, expand = _pack_gat_params(
        w, attn_l, attn_r, bias, h, f_out, f_out_p)
    x_bf = x.astype(jnp.bfloat16)             # pre-cast activations in wrapper

    tm = _pick_tile(n_pad, dst_tile)
    if n_pad // tm < 2 and tm > 128:          # keep >=2 dst tiles for v7x's 2 TCs
        tm = _pick_tile(n_pad, max(128, tm // 2))
    tn = _pick_tile(n_pad, src_tile)

    # ---- projection (lane-dense el^T / er^T outputs) ----
    z, el_t, er_t = pl.pallas_call(
        _proj_kernel,
        out_shape=(jax.ShapeDtypeStruct((n_pad, hfp), jnp.bfloat16),
                   jax.ShapeDtypeStruct((h, n_pad), jnp.float32),
                   jax.ShapeDtypeStruct((h, n_pad), jnp.float32)),
        grid=(n_pad // tm,),
        in_specs=[pl.BlockSpec((tm, f_in), lambda i: (i, 0)),
                  pl.BlockSpec((f_in, hfp), lambda i: (0, 0)),
                  pl.BlockSpec((h, hfp), lambda i: (0, 0)),
                  pl.BlockSpec((h, hfp), lambda i: (0, 0))],
        out_specs=(pl.BlockSpec((tm, hfp), lambda i: (i, 0)),
                   pl.BlockSpec((h, tm), lambda i: (0, i)),
                   pl.BlockSpec((h, tm), lambda i: (0, i))),
        compiler_params=pltpu.CompilerParams(
            dimension_semantics=("parallel",),
            vmem_limit_bytes=_VMEM_LIMIT),
    )(x_bf, w_p, a_l_t, a_r_t)

    er = er_t.T                               # tiny (H, N)->(N, H) transpose in XLA

    # ---- per-tile edge counts for sparsity skipping (scalar prefetch) ----
    n_dst, n_src = n_pad // tm, n_pad // tn
    tile_nnz = mask_i8.astype(jnp.int32).reshape(
        n_dst, tm, n_src, tn).sum(axis=(1, 3)).reshape(-1)        # (n_dst*n_src,)

    out_itemsize = 2 if out_dtype == jnp.bfloat16 else 4
    flops = 2 * h * n_pad * n_pad * f_out_p + 10 * h * n_pad * n_pad
    transc = h * n_pad * n_pad
    bytes_acc = (n_pad * n_pad                       # int8 mask
                 + n_dst * n_pad * hfp * 2           # bf16 z re-streamed per dst tile
                 + n_pad * hfp * out_itemsize        # output
                 + n_pad * 8 * h)                    # el/er

    acc_in_out = (out_dtype == jnp.float32)
    scratch = [pltpu.VMEM((tm, h), jnp.float32),     # running max
               pltpu.VMEM((tm, h), jnp.float32)]     # running denom
    if not acc_in_out:                               # bf16 out: keep f32 accumulator
        scratch.append(pltpu.VMEM((tm, hfp), jnp.float32))

    # NOTE(v5e): if xprof shows exposed mask/z DMA, add
    # pipeline_mode=pl.Buffered(3) on the mask and z BlockSpecs below.
    out = pl.pallas_call(
        _make_attn_kernel(h, f_out_p, apply_relu, acc_in_out),
        out_shape=jax.ShapeDtypeStruct((n_pad, hfp), out_dtype),
        grid_spec=pltpu.PrefetchScalarGridSpec(
            num_scalar_prefetch=1,
            grid=(n_dst, n_src),
            in_specs=[pl.BlockSpec((tm, h), lambda i, k, nnz: (i, 0)),     # er (dst)
                      pl.BlockSpec((h, tn), lambda i, k, nnz: (0, k)),     # el^T (src)
                      pl.BlockSpec((tn, hfp), lambda i, k, nnz: (k, 0)),   # z (src)
                      pl.BlockSpec((tm, tn), lambda i, k, nnz: (i, k)),    # int8 mask
                      pl.BlockSpec((1, hfp), lambda i, k, nnz: (0, 0)),    # bias
                      pl.BlockSpec((h, hfp), lambda i, k, nnz: (0, 0))],   # expand
            out_specs=pl.BlockSpec((tm, hfp), lambda i, k, nnz: (i, 0)),   # accumulator
            scratch_shapes=scratch),
        compiler_params=pltpu.CompilerParams(
            dimension_semantics=("parallel", "arbitrary"),                 # dst axis split over TCs
            vmem_limit_bytes=_VMEM_LIMIT),
        cost_estimate=pl.CostEstimate(flops=int(flops),
                                      transcendentals=int(transc),
                                      bytes_accessed=int(bytes_acc)),
    )(tile_nnz, er, el_t, z, mask_i8, b_p, expand)

    # slice away per-head lane padding (kernel output stays lane-dense)
    if f_out_p != f_out:
        out = out.reshape(n_pad, h, f_out_p)[:, :, :f_out].reshape(n_pad, h * f_out)
    return out


# --------------------------------------------------------------------------- #
# Kernel 3: edge-wise dot-product predictor  sigmoid(<h_u, h_v>)               #
# --------------------------------------------------------------------------- #
def _pred_kernel(hu_ref, hv_ref, o_ref):
    s = jnp.sum(hu_ref[...] * hv_ref[...], axis=0, keepdims=True)   # (1, te)
    o_ref[...] = jax.nn.sigmoid(s)


def dot_predictor(h, src, dst, *, edge_tile=4096):
    e = src.shape[0]
    f = h.shape[1]
    te = min(edge_tile, _round_up(e, 128))       # big tiles (or one block for small E)
    e_pad = _round_up(e, te)
    # TODO(synk): per-edge endpoint gather is done with XLA take outside the
    # kernel; for very large E move it in-kernel via PrefetchScalarGridSpec +
    # pl.Element row gather to avoid the transposed (F, E_pad) HBM copies.
    hu = jnp.zeros((e_pad, f), h.dtype).at[:e].set(h[src]).T        # (F, E_pad)
    hv = jnp.zeros((e_pad, f), h.dtype).at[:e].set(h[dst]).T
    scores = pl.pallas_call(
        _pred_kernel,
        out_shape=jax.ShapeDtypeStruct((1, e_pad), jnp.float32),    # lane-dense
        grid=(e_pad // te,),
        in_specs=[pl.BlockSpec((f, te), lambda i: (0, i)),
                  pl.BlockSpec((f, te), lambda i: (0, i))],
        out_specs=pl.BlockSpec((1, te), lambda i: (0, i)),
        compiler_params=pltpu.CompilerParams(
            dimension_semantics=("parallel",)),
    )(hu, hv)
    return scores[0, :e]


# --------------------------------------------------------------------------- #
# Model                                                                        #
# --------------------------------------------------------------------------- #
def init_params(key, in_feats, hidden_size, out_feats, num_heads):
    ks = jax.random.split(key, 8)

    def xav(k, shape, fan_in, fan_out):
        scale = jnp.sqrt(2.0 / (fan_in + fan_out)).astype(jnp.float32)
        return jax.random.normal(k, shape, jnp.float32) * scale

    return {
        # conv1: GATConv(in_feats, hidden_size, num_heads)
        "w1": xav(ks[0], (in_feats, num_heads * hidden_size),
                  in_feats, num_heads * hidden_size),
        "al1": xav(ks[1], (num_heads, hidden_size), hidden_size, 1),
        "ar1": xav(ks[2], (num_heads, hidden_size), hidden_size, 1),
        "b1": jnp.zeros((1, num_heads * hidden_size), jnp.float32),
        # conv2: GATConv(hidden_size * num_heads, out_feats, num_heads=1)
        "w2": xav(ks[3], (num_heads * hidden_size, out_feats),
                  num_heads * hidden_size, out_feats),
        "al2": xav(ks[4], (1, out_feats), out_feats, 1),
        "ar2": xav(ks[5], (1, out_feats), out_feats, 1),
        "b2": jnp.zeros((1, out_feats), jnp.float32),
    }


def gat_model_forward(params, mask, src, dst, features, edge_type=None, *,
                      hidden_size, out_feats, num_heads):
    del edge_type  # unused by the reference forward (kept for signature parity)
    n = features.shape[0]
    n_pad = _round_up(n, 128)
    x = jnp.zeros((n_pad, features.shape[1]), jnp.float32).at[:n].set(features)
    mask_i8 = jnp.zeros((n_pad, n_pad), jnp.int8).at[:n, :n].set(
        (mask > 0).astype(jnp.int8))                 # int8 mask: 4x less HBM/VMEM

    # conv1 -> view(N, H*hidden) -> relu (relu fused), bf16 inter-layer features
    h = gat_layer(x, params["w1"], params["al1"], params["ar1"], params["b1"],
                  mask_i8, num_heads=num_heads, f_out=hidden_size,
                  apply_relu=True, out_dtype=jnp.bfloat16)
    # conv2 (1 head) -> squeeze -> relu; f32 out accumulated directly in o_ref
    h = gat_layer(h, params["w2"], params["al2"], params["ar2"], params["b2"],
                  mask_i8, num_heads=1, f_out=out_feats,
                  apply_relu=True, out_dtype=jnp.float32)
    # DotProductPredictor: sigmoid(<h_u, h_v>) per edge, edge-wise (no dense NxN)
    return dot_predictor(h, src, dst)


if __name__ == "__main__":
    N = 16
    in_feats, hidden_size, out_feats, num_heads = 8, 16, 16, 8

    key = jax.random.PRNGKey(0)
    kf, kp = jax.random.split(key)

    features = jax.random.normal(kf, (N, in_feats), jnp.float32)

    # deterministic graph: ring + skip-5 ring => every node has in-degree 2
    src = jnp.concatenate([jnp.arange(N), jnp.arange(N)]).astype(jnp.int32)
    dst = jnp.concatenate([(jnp.arange(N) + 1) % N,
                           (jnp.arange(N) + 5) % N]).astype(jnp.int32)
    mask = jnp.zeros((N, N), jnp.float32).at[dst, src].set(1.0)   # mask[dst, src]
    edge_type = jnp.zeros((src.shape[0],), jnp.int32)             # unused

    params = init_params(kp, in_feats, hidden_size, out_feats, num_heads)

    scores = gat_model_forward(params, mask, src, dst, features, edge_type,
                               hidden_size=hidden_size, out_feats=out_feats,
                               num_heads=num_heads)
    scores = jax.block_until_ready(scores)
    assert scores.shape == (src.shape[0],)
    assert bool(jnp.all(jnp.isfinite(scores)))
    print("KERNEL_OK")
</pallas_src>

<mosaic_0001>
module attributes {stable_mosaic.version = 11 : i64} {
  func.func @_proj_kernel(%arg0: i32, %arg1: memref<128x8xbf16, #tpu.memory_space<vmem>>, %arg2: memref<8x128xbf16, #tpu.memory_space<vmem>>, %arg3: memref<8x128xf32, #tpu.memory_space<vmem>>, %arg4: memref<8x128xf32, #tpu.memory_space<vmem>>, %arg5: memref<128x128xbf16, #tpu.memory_space<vmem>>, %arg6: memref<8x128xf32, #tpu.memory_space<vmem>>, %arg7: memref<8x128xf32, #tpu.memory_space<vmem>>) attributes {dimension_semantics = [#tpu.dimension_semantics<parallel>], iteration_bounds = array<i64: 1>, scalar_prefetch = 0 : i64, scratch_operands = 0 : i64, tpu.core_type = #tpu.core_type<tc>, window_params = [{transform_indices = @transform_0, window_bounds = array<i64: 128, 8>}, {pipeline_mode = #tpu.pipeline_mode<synchronous>, transform_indices = @transform_1, window_bounds = array<i64: 8, 128>}, {pipeline_mode = #tpu.pipeline_mode<synchronous>, transform_indices = @transform_2, window_bounds = array<i64: 8, 128>}, {pipeline_mode = #tpu.pipeline_mode<synchronous>, transform_indices = @transform_3, window_bounds = array<i64: 8, 128>}, {transform_indices = @transform_4, window_bounds = array<i64: 128, 128>}, {transform_indices = @transform_5, window_bounds = array<i64: 8, 128>}, {transform_indices = @transform_6, window_bounds = array<i64: 8, 128>}]} {
    %c0 = arith.constant 0 : index
    %c0_0 = arith.constant 0 : index
    %0 = vector.load %arg1[%c0, %c0_0] : memref<128x8xbf16, #tpu.memory_space<vmem>>, vector<128x8xbf16>
    %c0_1 = arith.constant 0 : index
    %c0_2 = arith.constant 0 : index
    %1 = vector.load %arg2[%c0_1, %c0_2] : memref<8x128xbf16, #tpu.memory_space<vmem>>, vector<8x128xbf16>
    %cst = arith.constant dense<0.000000e+00> : vector<128x128xf32>
    %2 = tpu.matmul %0, %1, %cst {dimension_numbers = #tpu.dot_dimension_numbers<[1], [0], [0], [1], [0, 0, 1, 1], [], []>} : vector<128x8xbf16>, vector<8x128xbf16>, vector<128x128xf32> -> vector<128x128xf32>
    %3 = arith.truncf %2 : vector<128x128xf32> to vector<128x128xbf16>
    %c0_3 = arith.constant 0 : index
    %c0_4 = arith.constant 0 : index
    %4 = vector.load %arg5[%c0_3, %c0_4] : memref<128x128xbf16, #tpu.memory_space<vmem>>, vector<128x128xbf16>
    tpu.vector_store %arg5[%c0_3, %c0_4], %3 {strides = array<i32>} : memref<128x128xbf16, #tpu.memory_space<vmem>>, vector<128x128xbf16>,
    %c0_5 = arith.constant 0 : index
    %c0_6 = arith.constant 0 : index
    %5 = vector.load %arg3[%c0_5, %c0_6] : memref<8x128xf32, #tpu.memory_space<vmem>>, vector<8x128xf32>
    %cst_7 = arith.constant dense<0.000000e+00> : vector<8x128xf32>
    %6 = tpu.matmul %5, %2, %cst_7 {dimension_numbers = #tpu.dot_dimension_numbers<[1], [1], [0], [0], [0, 0, 1, 0], [], []>} : vector<8x128xf32>, vector<128x128xf32>, vector<8x128xf32> -> vector<8x128xf32>
    %c0_8 = arith.constant 0 : index
    %c0_9 = arith.constant 0 : index
    %7 = vector.load %arg6[%c0_8, %c0_9] : memref<8x128xf32, #tpu.memory_space<vmem>>, vector<8x128xf32>
    tpu.vector_store %arg6[%c0_8, %c0_9], %6 {strides = array<i32>} : memref<8x128xf32, #tpu.memory_space<vmem>>, vector<8x128xf32>,
    %c0_10 = arith.constant 0 : index
    %c0_11 = arith.constant 0 : index
    %8 = vector.load %arg4[%c0_10, %c0_11] : memref<8x128xf32, #tpu.memory_space<vmem>>, vector<8x128xf32>
    %cst_12 = arith.constant dense<0.000000e+00> : vector<8x128xf32>
    %9 = tpu.matmul %8, %2, %cst_12 {dimension_numbers = #tpu.dot_dimension_numbers<[1], [1], [0], [0], [0, 0, 1, 0], [], []>} : vector<8x128xf32>, vector<128x128xf32>, vector<8x128xf32> -> vector<8x128xf32>
    %c0_13 = arith.constant 0 : index
    %c0_14 = arith.constant 0 : index
    %10 = vector.load %arg7[%c0_13, %c0_14] : memref<8x128xf32, #tpu.memory_space<vmem>>, vector<8x128xf32>
    tpu.vector_store %arg7[%c0_13, %c0_14], %9 {strides = array<i32>} : memref<8x128xf32, #tpu.memory_space<vmem>>, vector<8x128xf32>,
    return
  }
  func.func @transform_0(%arg0: i32) -> (i32, i32) {
    %c0_i32 = arith.constant 0 : i32
    %c0_i32_0 = arith.constant 0 : i32
    return %arg0, %c0_i32 : i32, i32
  }
  func.func @transform_1(%arg0: i32) -> (i32, i32) {
    %c0_i32 = arith.constant 0 : i32
    %c0_i32_0 = arith.constant 0 : i32
    %c0_i32_1 = arith.constant 0 : i32
    return %c0_i32, %c0_i32_0 : i32, i32
  }
  func.func @transform_2(%arg0: i32) -> (i32, i32) {
    %c0_i32 = arith.constant 0 : i32
    %c0_i32_0 = arith.constant 0 : i32
    %c0_i32_1 = arith.constant 0 : i32
    return %c0_i32, %c0_i32_0 : i32, i32
  }
  func.func @transform_3(%arg0: i32) -> (i32, i32) {
    %c0_i32 = arith.constant 0 : i32
    %c0_i32_0 = arith.constant 0 : i32
    %c0_i32_1 = arith.constant 0 : i32
    return %c0_i32, %c0_i32_0 : i32, i32
  }
  func.func @transform_4(%arg0: i32) -> (i32, i32) {
    %c0_i32 = arith.constant 0 : i32
    %c0_i32_0 = arith.constant 0 : i32
    return %arg0, %c0_i32 : i32, i32
  }
  func.func @transform_5(%arg0: i32) -> (i32, i32) {
    %c0_i32 = arith.constant 0 : i32
    %c0_i32_0 = arith.constant 0 : i32
    return %c0_i32, %arg0 : i32, i32
  }
  func.func @transform_6(%arg0: i32) -> (i32, i32) {
    %c0_i32 = arith.constant 0 : i32
    %c0_i32_0 = arith.constant 0 : i32
    return %c0_i32, %arg0 : i32, i32
  }
}

</mosaic_0001>

<llo_original>
// kernel: tpu_custom_call.1
$region0: #{tpu_custom_call.1}
  #allocation0 [shape = 'u32[]', space=smem, size = 0x4, offset = 0x4, fixed_abs, tag = 'smem constant byte address 0x4 - core index']
  #allocation1 [shape = 'u32[144,128]{1,0:T(1,128)}', space=vmem, size = 0x12000, scoped, tag = 'internal scratch']
  %s0 = inlined_call_operand.vmem [shape: bf16[128,8], index: 0, kind: input, shape index: {}]
  %s1 = inlined_call_operand.vmem [shape: bf16[8,128], index: 1, kind: input, shape index: {}]
  %s2 = inlined_call_operand.vmem [shape: f32[8,128], index: 2, kind: input, shape index: {}]
  %s3 = inlined_call_operand.vmem [shape: f32[8,128], index: 3, kind: input, shape index: {}]
  %s4 = inlined_call_operand.hbm [shape: bf16[128,128], index: 4, kind: output, shape index: {0}]
  %s5 = inlined_call_operand.hbm [shape: f32[8,128], index: 5, kind: output, shape index: {1}]
  %s6 = inlined_call_operand.hbm [shape: f32[8,128], index: 6, kind: output, shape index: {2}]
  %7 = xla_tuple %s4, %s5, %s6
  %s8 = sld [smem:[#allocation0]]
  $region42: #{tpu_custom_call.1} parent=0
    _
  %s10 = ssub.s32 1, %s8
  %s11 = scalar_select 0, %s10, %s8
  $region1: #{tpu_custom_call.1} parent=0
    #allocation2 [shape = 'u8[32768]{0}', space=vmem, size = 0x8000, scoped, tag = 'output window, operand 0, single buffered']
    #allocation3 [shape = 's32[1]{0}', space=sflag, size = 0x4, scoped, tag = 'scoped memory for tpu_custom_call.1']
    #allocation4 [shape = 'u8[4096]{0}', space=vmem, size = 0x1000, scoped, tag = 'output window, operand 1, single buffered']
    #allocation5 [shape = 's32[1]{0}', space=sflag, size = 0x4, scoped, tag = 'scoped memory for tpu_custom_call.1']
    #allocation6 [shape = 'u8[4096]{0}', space=vmem, size = 0x1000, scoped, tag = 'output window, operand 2, single buffered']
    %12 = vsyncpa [#allocation3], 0
    %13 = vsyncpa [#allocation5], 0
    // Predicated region
    $region2: #{tpu_custom_call.1} parent=1 // pred_check
      _
    $region3: #{tpu_custom_call.1} parent=1 // pred_check_branch
      %15 = sbr.rel (0) target = $region5
    $region4: #{tpu_custom_call.1} parent=1 // pred_region
      _
    $region5: #{tpu_custom_call.1} parent=1 // pred_fallthru
      _
    // Predicated region
    $region6: #{tpu_custom_call.1} parent=1 // pred_check
      _
    $region7: #{tpu_custom_call.1} parent=1 // pred_check_branch
      %17 = sbr.rel (0) target = $region9
    $region8: #{tpu_custom_call.1} parent=1 // pred_region
      _
    $region9: #{tpu_custom_call.1} parent=1 // pred_fallthru
      _
    // Predicated region
    $region10: #{tpu_custom_call.1} parent=1 // pred_check
      _
    $region11: #{tpu_custom_call.1} parent=1 // pred_check_branch
      %19 = sbr.rel (0) target = $region13
    $region12: #{tpu_custom_call.1} parent=1 // pred_region
      _
    $region13: #{tpu_custom_call.1} parent=1 // pred_fallthru
      _
    // Predicated region
    $region14: #{tpu_custom_call.1} parent=1 // pred_check
      _
    $region15: #{tpu_custom_call.1} parent=1 // pred_check_branch
      %21 = sbr.rel (0) target = $region17
    $region16: #{tpu_custom_call.1} parent=1 // pred_region
      _
    $region17: #{tpu_custom_call.1} parent=1 // pred_fallthru
      _
    %v23 = vld [vmem:[%s0] sm:$0xf]
    %v24 = vld [vmem:[%s0 + $0x4] sm:$0xf]
    %v25 = vld [vmem:[%s0 + $0x8] sm:$0xf]
    %v26 = vld [vmem:[%s0 + $0xc] sm:$0xf]
    %v27 = vld [vmem:[%s0 + $0x10] sm:$0xf]
    %v28 = vld [vmem:[%s0 + $0x14] sm:$0xf]
    %v29 = vld [vmem:[%s0 + $0x18] sm:$0xf]
    %v30 = vld [vmem:[%s0 + $0x1c] sm:$0xf]
    %v31 = vld [vmem:[%s0 + $0x20] sm:$0xf]
    %v32 = vld [vmem:[%s0 + $0x24] sm:$0xf]
    %v33 = vld [vmem:[%s0 + $0x28] sm:$0xf]
    %v34 = vld [vmem:[%s0 + $0x2c] sm:$0xf]
    %v35 = vld [vmem:[%s0 + $0x30] sm:$0xf]
    %v36 = vld [vmem:[%s0 + $0x34] sm:$0xf]
    %v37 = vld [vmem:[%s0 + $0x38] sm:$0xf]
    %v38 = vld [vmem:[%s0 + $0x3c] sm:$0xf]
    %v39 = vld [vmem:[%s1] sm:$0xf]
    %v56 = vunpack.c.l.b16 %v23
    %v57 = vunpack.c.l.b16 %v24
    %v58 = vunpack.c.l.b16 %v25
    %v59 = vunpack.c.l.b16 %v26
    %v60 = vunpack.c.l.b16 %v27
    %v61 = vunpack.c.l.b16 %v28
    %v62 = vunpack.c.l.b16 %v29
    %v63 = vunpack.c.l.b16 %v30
    %v64 = vunpack.c.l.b16 %v31
    %v65 = vunpack.c.l.b16 %v32
    %v66 = vunpack.c.l.b16 %v33
    %v67 = vunpack.c.l.b16 %v34
    %v68 = vunpack.c.l.b16 %v35
    %v69 = vunpack.c.l.b16 %v36
    %v70 = vunpack.c.l.b16 %v37
    %v71 = vunpack.c.l.b16 %v38
    %v72 = vpack.c.b16 %v57, %v56
    %v73 = vpack.c.b16 %v59, %v58
    %v74 = vpack.c.b16 %v61, %v60
    %v75 = vpack.c.b16 %v63, %v62
    %v76 = vpack.c.b16 %v65, %v64
    %v77 = vpack.c.b16 %v67, %v66
    %v78 = vpack.c.b16 %v69, %v68
    %v79 = vpack.c.b16 %v71, %v70
    %vm80 = vcmask 64512
    %v82 = vsel %vm80, %v72, 0
    %v85 = vsel %vm80, %v73, 0
    %v88 = vsel %vm80, %v74, 0
    %v91 = vsel %vm80, %v75, 0
    %v94 = vsel %vm80, %v76, 0
    %v97 = vsel %vm80, %v77, 0
    %v100 = vsel %vm80, %v78, 0
    %v103 = vsel %vm80, %v79, 0
    %vm105 = vcmask 1043456
    %v107 = vsel %vm105, %v39, 0
    %109 = vmatprep.subr.bf16.mxu0 0
    %110 = vmatpush1.bf16.msra.mxu0 %v107
    %111 = vmatprep.subr.bf16.mxu0 0
    %112 = vmatpush1.bf16.msra.mxu0 0
    %113 = vmatprep.subr.bf16.mxu0 0
    %114 = vmatpush1.bf16.msra.mxu0 0
    %115 = vmatprep.subr.bf16.mxu0 0
    %116 = vmatpush1.bf16.msra.mxu0 0
    %117 = vmatprep.subr.bf16.mxu0 0
    %118 = vmatpush1.bf16.msra.mxu0 0
    %119 = vmatprep.subr.bf16.mxu0 0
    %120 = vmatpush1.bf16.msra.mxu0 0
    %121 = vmatprep.subr.bf16.mxu0 0
    %122 = vmatpush1.bf16.msra.mxu0 0
    %123 = vmatprep.subr.bf16.mxu0 0
    %124 = vmatpush1.bf16.msra.mxu0 0
    %125 = vmatprep.subr.bf16.mxu0 0
    %126 = vmatpush1.bf16.msra.mxu0 0
    %127 = vmatprep.subr.bf16.mxu0 0
    %128 = vmatpush1.bf16.msra.mxu0 0
    %129 = vmatprep.subr.bf16.mxu0 0
    %130 = vmatpush1.bf16.msra.mxu0 0
    %131 = vmatprep.subr.bf16.mxu0 0
    %132 = vmatpush1.bf16.msra.mxu0 0
    %133 = vmatprep.subr.bf16.mxu0 0
    %134 = vmatpush1.bf16.msra.mxu0 0
    %135 = vmatprep.subr.bf16.mxu0 0
    %136 = vmatpush1.bf16.msra.mxu0 0
    %137 = vmatprep.subr.bf16.mxu0 0
    %138 = vmatpush1.bf16.msra.mxu0 0
    %139 = vmatprep.subr.bf16.mxu0 0
    %140 = vmatpush1.bf16.msra.mxu0 0
    %141 = vmatprep.mubr.bf16.mxu0 0
    %142 = vmatmul.mubr.bf16.gmra.mrb[0].mxu0 %v82
    %v143 = vpop.f32.mrb[0].mxu0
    %v144 = vadd.f32 0.0, %v143
    %v145 = vpop.f32.mrb[0].mxu0
    %v146 = vpop.f32.mrb[0].mxu0
    %v147 = vadd.f32 0.0, %v146
    %v148 = vpop.f32.mrb[0].mxu0
    %149 = vmatprep.mubr.bf16.mxu0 0
    %150 = vmatmul.mubr.bf16.gmra.mrb[0].mxu0 %v85
    %v151 = vpop.f32.mrb[0].mxu0
    %v152 = vadd.f32 0.0, %v151
    %v153 = vpop.f32.mrb[0].mxu0
    %v154 = vpop.f32.mrb[0].mxu0
    %v155 = vadd.f32 0.0, %v154
    %v156 = vpop.f32.mrb[0].mxu0
    %157 = vmatprep.mubr.bf16.mxu0 0
    %158 = vmatmul.mubr.bf16.gmra.mrb[0].mxu0 %v88
    %v159 = vpop.f32.mrb[0].mxu0
    %v160 = vadd.f32 0.0, %v159
    %v161 = vpop.f32.mrb[0].mxu0
    %v162 = vpop.f32.mrb[0].mxu0
    %v163 = vadd.f32 0.0, %v162
    %v164 = vpop.f32.mrb[0].mxu0
    %165 = vmatprep.mubr.bf16.mxu0 0
    %166 = vmatmul.mubr.bf16.gmra.mrb[0].mxu0 %v91
    %v167 = vpop.f32.mrb[0].mxu0
    %v168 = vadd.f32 0.0, %v167
    %v169 = vpop.f32.mrb[0].mxu0
    %v170 = vpop.f32.mrb[0].mxu0
    %v171 = vadd.f32 0.0, %v170
    %v172 = vpop.f32.mrb[0].mxu0
    %173 = vmatprep.mubr.bf16.mxu0 0
    %174 = vmatmul.mubr.bf16.gmra.mrb[0].mxu0 %v94
    %v175 = vpop.f32.mrb[0].mxu0
    %v176 = vadd.f32 0.0, %v175
    %v177 = vpop.f32.mrb[0].mxu0
    %v178 = vpop.f32.mrb[0].mxu0
    %v179 = vadd.f32 0.0, %v178
    %v180 = vpop.f32.mrb[0].mxu0
    %181 = vmatprep.mubr.bf16.mxu0 0
    %182 = vmatmul.mubr.bf16.gmra.mrb[0].mxu0 %v97
    %v183 = vpop.f32.mrb[0].mxu0
    %v184 = vadd.f32 0.0, %v183
    %v185 = vpop.f32.mrb[0].mxu0
    %v186 = vpop.f32.mrb[0].mxu0
    %v187 = vadd.f32 0.0, %v186
    %v188 = vpop.f32.mrb[0].mxu0
    %189 = vmatprep.mubr.bf16.mxu0 0
    %190 = vmatmul.mubr.bf16.gmra.mrb[0].mxu0 %v100
    %v191 = vpop.f32.mrb[0].mxu0
    %v192 = vadd.f32 0.0, %v191
    %v193 = vpop.f32.mrb[0].mxu0
    %v194 = vpop.f32.mrb[0].mxu0
    %v195 = vadd.f32 0.0, %v194
    %v196 = vpop.f32.mrb[0].mxu0
    %197 = vmatprep.mubr.bf16.mxu0 0
    %198 = vmatmul.mubr.bf16.gmra.mrb[0].mxu0 %v103
    %v199 = vpop.f32.mrb[0].mxu0
    %v200 = vadd.f32 0.0, %v199
    %v201 = vpop.f32.mrb[0].mxu0
    %v202 = vpop.f32.mrb[0].mxu0
    %v203 = vadd.f32 0.0, %v202
    %v204 = vpop.f32.mrb[0].mxu0
    %205 = vdwg.mxu0
    %v206 = vpack.c.bf16 %v147, %v144
    %v207 = vpack.c.bf16 %v155, %v152
    %v208 = vpack.c.bf16 %v163, %v160
    %v209 = vpack.c.bf16 %v171, %v168
    %v210 = vpack.c.bf16 %v179, %v176
    %v211 = vpack.c.bf16 %v187, %v184
    %v212 = vpack.c.bf16 %v195, %v192
    %v213 = vpack.c.bf16 %v203, %v200
    %v222 = vunpack.c.l.b16 %v206
    %v223 = vunpack.c.h.b16 %v206
    %v224 = vunpack.c.l.b16 %v207
    %v225 = vunpack.c.h.b16 %v207
    %v226 = vunpack.c.l.b16 %v208
    %v227 = vunpack.c.h.b16 %v208
    %v228 = vunpack.c.l.b16 %v209
    %v229 = vunpack.c.h.b16 %v209
    %v230 = vunpack.c.l.b16 %v210
    %v231 = vunpack.c.h.b16 %v210
    %v232 = vunpack.c.l.b16 %v211
    %v233 = vunpack.c.h.b16 %v211
    %v234 = vunpack.c.l.b16 %v212
    %v235 = vunpack.c.h.b16 %v212
    %v236 = vunpack.c.l.b16 %v213
    %v237 = vunpack.c.h.b16 %v213
    %v238 = vpack.c.b16 %v222, %v222
    %v239 = vpack.c.b16 %v223, %v223
    %v240 = vpack.c.b16 %v224, %v224
    %v241 = vpack.c.b16 %v225, %v225
    %v242 = vpack.c.b16 %v226, %v226
    %v243 = vpack.c.b16 %v227, %v227
    %v244 = vpack.c.b16 %v228, %v228
    %v245 = vpack.c.b16 %v229, %v229
    %v246 = vpack.c.b16 %v230, %v230
    %v247 = vpack.c.b16 %v231, %v231
    %v248 = vpack.c.b16 %v232, %v232
    %v249 = vpack.c.b16 %v233, %v233
    %v250 = vpack.c.b16 %v234, %v234
    %v251 = vpack.c.b16 %v235, %v235
    %v252 = vpack.c.b16 %v236, %v236
    %v253 = vpack.c.b16 %v237, %v237
    %270 = vst [vmem:[#allocation2] sm:$0xf] %v238
    %271 = vst [vmem:[#allocation2 + $0x4] sm:$0xf] %v239
    %272 = vst [vmem:[#allocation2 + $0x8] sm:$0xf] %v240
    %273 = vst [vmem:[#allocation2 + $0xc] sm:$0xf] %v241
    %274 = vst [vmem:[#allocation2 + $0x10] sm:$0xf] %v242
    %275 = vst [vmem:[#allocation2 + $0x14] sm:$0xf] %v243
    %276 = vst [vmem:[#allocation2 + $0x18] sm:$0xf] %v244
    %277 = vst [vmem:[#allocation2 + $0x1c] sm:$0xf] %v245
    %278 = vst [vmem:[#allocation2 + $0x20] sm:$0xf] %v246
    %279 = vst [vmem:[#allocation2 + $0x24] sm:$0xf] %v247
    %280 = vst [vmem:[#allocation2 + $0x28] sm:$0xf] %v248
    %281 = vst [vmem:[#allocation2 + $0x2c] sm:$0xf] %v249
    %282 = vst [vmem:[#allocation2 + $0x30] sm:$0xf] %v250
    %283 = vst [vmem:[#allocation2 + $0x34] sm:$0xf] %v251
    %284 = vst [vmem:[#allocation2 + $0x38] sm:$0xf] %v252
    %285 = vst [vmem:[#allocation2 + $0x3c] sm:$0xf] %v253
    %v286 = vld [vmem:[%s2] sm:$0xff]
    %287 = vmatprep.subr.mxu0 0.0
    %288 = vmatpush1.xpose.msra.mxu0 %v144
    %289 = vmatprep.subr.mxu0 0.0
    %290 = vmatpush1.xpose.msra.mxu0 %v147
    %291 = vmatprep.subr.mxu0 0.0
    %292 = vmatpush1.xpose.msra.mxu0 %v152
    %293 = vmatprep.subr.mxu0 0.0
    %294 = vmatpush1.xpose.msra.mxu0 %v155
    %295 = vmatprep.subr.mxu0 0.0
    %296 = vmatpush1.xpose.msra.mxu0 %v160
    %297 = vmatprep.subr.mxu0 0.0
    %298 = vmatpush1.xpose.msra.mxu0 %v163
    %299 = vmatprep.subr.mxu0 0.0
    %300 = vmatpush1.xpose.msra.mxu0 %v168
    %301 = vmatprep.subr.mxu0 0.0
    %302 = vmatpush1.xpose.msra.mxu0 %v171
    %303 = vmatprep.subr.mxu0 0.0
    %304 = vmatpush1.xpose.msra.mxu0 %v176
    %305 = vmatprep.subr.mxu0 0.0
    %306 = vmatpush1.xpose.msra.mxu0 %v179
    %307 = vmatprep.subr.mxu0 0.0
    %308 = vmatpush1.xpose.msra.mxu0 %v184
    %309 = vmatprep.subr.mxu0 0.0
    %310 = vmatpush1.xpose.msra.mxu0 %v187
    %311 = vmatprep.subr.mxu0 0.0
    %312 = vmatpush1.xpose.msra.mxu0 %v192
    %313 = vmatprep.subr.mxu0 0.0
    %314 = vmatpush1.xpose.msra.mxu0 %v195
    %315 = vmatprep.subr.mxu0 0.0
    %316 = vmatpush1.xpose.msra.mxu0 %v200
    %317 = vmatprep.subr.mxu0 0.0
    %318 = vmatpush1.xpose.msra.mxu0 %v203
    %319 = vmatprep.subr.mxu0 0.0
    %320 = vmatpush1.xpose.msra.mxu0 0.0
    %321 = vmatprep.subr.mxu0 0.0
    %322 = vmatpush1.xpose.msra.mxu0 0.0
    %323 = vmatprep.subr.mxu0 0.0
    %324 = vmatpush1.xpose.msra.mxu0 0.0
    %325 = vmatprep.subr.mxu0 0.0
    %326 = vmatpush1.xpose.msra.mxu0 0.0
    %327 = vmatprep.subr.mxu0 0.0
    %328 = vmatpush1.xpose.msra.mxu0 0.0
    %329 = vmatprep.subr.mxu0 0.0
    %330 = vmatpush1.xpose.msra.mxu0 0.0
    %331 = vmatprep.subr.mxu0 0.0
    %332 = vmatpush1.xpose.msra.mxu0 0.0
    %333 = vmatprep.subr.mxu0 0.0
    %334 = vmatpush1.xpose.msra.mxu0 0.0
    %335 = vmatprep.subr.mxu0 0.0
    %336 = vmatpush1.xpose.msra.mxu0 0.0
    %337 = vmatprep.subr.mxu0 0.0
    %338 = vmatpush1.xpose.msra.mxu0 0.0
    %339 = vmatprep.subr.mxu0 0.0
    %340 = vmatpush1.xpose.msra.mxu0 0.0
    %341 = vmatprep.subr.mxu0 0.0
    %342 = vmatpush1.xpose.msra.mxu0 0.0
    %343 = vmatprep.subr.mxu0 0.0
    %344 = vmatpush1.xpose.msra.mxu0 0.0
    %345 = vmatprep.subr.mxu0 0.0
    %346 = vmatpush1.xpose.msra.mxu0 0.0
    %347 = vmatprep.subr.mxu0 0.0
    %348 = vmatpush1.xpose.msra.mxu0 0.0
    %349 = vmatprep.subr.mxu0 0.0
    %350 = vmatpush1.xpose.msra.mxu0 0.0
    %351 = vmatprep.mubr.f32.mxu0 0.0
    %352 = vmatmul.mubr.f32.gmra.mrb[0].mxu0 %v286
    %v353 = vpop.f32.mrb[0].mxu0
    %v354 = vadd.f32 0.0, %v353
    %v355 = vpop.f32.mrb[0].mxu0
    %356 = vdwg.mxu0
    %357 = vst [vmem:[#allocation4] sm:$0xff] %v354
    %v358 = vld [vmem:[%s3] sm:$0xff]
    %359 = vmatprep.subr.mxu0 0.0
    %360 = vmatpush1.xpose.msra.mxu0 %v144
    %361 = vmatprep.subr.mxu0 0.0
    %362 = vmatpush1.xpose.msra.mxu0 %v147
    %363 = vmatprep.subr.mxu0 0.0
    %364 = vmatpush1.xpose.msra.mxu0 %v152
    %365 = vmatprep.subr.mxu0 0.0
    %366 = vmatpush1.xpose.msra.mxu0 %v155
    %367 = vmatprep.subr.mxu0 0.0
    %368 = vmatpush1.xpose.msra.mxu0 %v160
    %369 = vmatprep.subr.mxu0 0.0
    %370 = vmatpush1.xpose.msra.mxu0 %v163
    %371 = vmatprep.subr.mxu0 0.0
    %372 = vmatpush1.xpose.msra.mxu0 %v168
    %373 = vmatprep.subr.mxu0 0.0
    %374 = vmatpush1.xpose.msra.mxu0 %v171
    %375 = vmatprep.subr.mxu0 0.0
    %376 = vmatpush1.xpose.msra.mxu0 %v176
    %377 = vmatprep.subr.mxu0 0.0
    %378 = vmatpush1.xpose.msra.mxu0 %v179
    %379 = vmatprep.subr.mxu0 0.0
    %380 = vmatpush1.xpose.msra.mxu0 %v184
    %381 = vmatprep.subr.mxu0 0.0
    %382 = vmatpush1.xpose.msra.mxu0 %v187
    %383 = vmatprep.subr.mxu0 0.0
    %384 = vmatpush1.xpose.msra.mxu0 %v192
    %385 = vmatprep.subr.mxu0 0.0
    %386 = vmatpush1.xpose.msra.mxu0 %v195
    %387 = vmatprep.subr.mxu0 0.0
    %388 = vmatpush1.xpose.msra.mxu0 %v200
    %389 = vmatprep.subr.mxu0 0.0
    %390 = vmatpush1.xpose.msra.mxu0 %v203
    %391 = vmatprep.subr.mxu0 0.0
    %392 = vmatpush1.xpose.msra.mxu0 0.0
    %393 = vmatprep.subr.mxu0 0.0
    %394 = vmatpush1.xpose.msra.mxu0 0.0
    %395 = vmatprep.subr.mxu0 0.0
    %396 = vmatpush1.xpose.msra.mxu0 0.0
    %397 = vmatprep.subr.mxu0 0.0
    %398 = vmatpush1.xpose.msra.mxu0 0.0
    %399 = vmatprep.subr.mxu0 0.0
    %400 = vmatpush1.xpose.msra.mxu0 0.0
    %401 = vmatprep.subr.mxu0 0.0
    %402 = vmatpush1.xpose.msra.mxu0 0.0
    %403 = vmatprep.subr.mxu0 0.0
    %404 = vmatpush1.xpose.msra.mxu0 0.0
    %405 = vmatprep.subr.mxu0 0.0
    %406 = vmatpush1.xpose.msra.mxu0 0.0
    %407 = vmatprep.subr.mxu0 0.0
    %408 = vmatpush1.xpose.msra.mxu0 0.0
    %409 = vmatprep.subr.mxu0 0.0
    %410 = vmatpush1.xpose.msra.mxu0 0.0
    %411 = vmatprep.subr.mxu0 0.0
    %412 = vmatpush1.xpose.msra.mxu0 0.0
    %413 = vmatprep.subr.mxu0 0.0
    %414 = vmatpush1.xpose.msra.mxu0 0.0
    %415 = vmatprep.subr.mxu0 0.0
    %416 = vmatpush1.xpose.msra.mxu0 0.0
    %417 = vmatprep.subr.mxu0 0.0
    %418 = vmatpush1.xpose.msra.mxu0 0.0
    %419 = vmatprep.subr.mxu0 0.0
    %420 = vmatpush1.xpose.msra.mxu0 0.0
    %421 = vmatprep.subr.mxu0 0.0
    %422 = vmatpush1.xpose.msra.mxu0 0.0
    %423 = vmatprep.mubr.f32.mxu0 0.0
    %424 = vmatmul.mubr.f32.gmra.mrb[0].mxu0 %v358
    %v425 = vpop.f32.mrb[0].mxu0
    %v426 = vadd.f32 0.0, %v425
    %v427 = vpop.f32.mrb[0].mxu0
    %428 = vdwg.mxu0
    %429 = vst [vmem:[#allocation6] sm:$0xff] %v426
    // Predicated region
    $region18: #{tpu_custom_call.1} parent=1 // pred_check
      _
    $region19: #{tpu_custom_call.1} parent=1 // pred_check_branch
      %431 = sbr.rel (0) target = $region21
    $region20: #{tpu_custom_call.1} parent=1 // pred_region
      %s433 = ssub.s32 1024, 1024
      %434 = vsyncadd [#allocation3], %s433
      %s435 = sshll.u32 [#allocation2], 4
      %s436 = int_to_ptr.vmem [resolvable:$true] %s435
      %441 = dma.vmem_to_hbm [thread:$0]  %s436, 1024, %s4, [#allocation3], 64, 64, 4
    $region21: #{tpu_custom_call.1} parent=1 // pred_fallthru
      _
    // Predicated region
    $region22: #{tpu_custom_call.1} parent=1 // pred_check
      _
    $region23: #{tpu_custom_call.1} parent=1 // pred_check_branch
      %443 = sbr.rel (0) target = $region25
    $region24: #{tpu_custom_call.1} parent=1 // pred_region
      %s445 = ssub.s32 128, 128
      %446 = vsyncadd [#allocation5], %s445
      %s448 = sshll.u32 [#allocation4], 4
      %s449 = int_to_ptr.vmem [resolvable:$true] %s448
      %451 = dma.vmem_to_hbm [thread:$0]  %s449, 128, %s5, [#allocation5]
    $region25: #{tpu_custom_call.1} parent=1 // pred_fallthru
      _
    // Predicated region
    $region26: #{tpu_custom_call.1} parent=1 // pred_check
      _
    $region27: #{tpu_custom_call.1} parent=1 // pred_check_branch
      %453 = sbr.rel (0) target = $region29
    $region28: #{tpu_custom_call.1} parent=1 // pred_region
      %s455 = ssub.s32 128, 128
      %456 = vsyncadd [#allocation5], %s455
      %s458 = sshll.u32 [#allocation6], 4
      %s459 = int_to_ptr.vmem [resolvable:$true] %s458
      %461 = dma.vmem_to_hbm [thread:$0]  %s459, 128, %s6, [#allocation5]
    $region29: #{tpu_custom_call.1} parent=1 // pred_fallthru
      _
    // Predicated region
    $region30: #{tpu_custom_call.1} parent=1 // pred_check
      _
    $region31: #{tpu_custom_call.1} parent=1 // pred_check_branch
      %463 = sbr.rel (0) target = $region33
    $region32: #{tpu_custom_call.1} parent=1 // pred_region
      %464 = dma.done [#allocation3], 1024
    $region33: #{tpu_custom_call.1} parent=1 // pred_fallthru
      _
    // Predicated region
    $region34: #{tpu_custom_call.1} parent=1 // pred_check
      _
    $region35: #{tpu_custom_call.1} parent=1 // pred_check_branch
      %466 = sbr.rel (0) target = $region37
    $region36: #{tpu_custom_call.1} parent=1 // pred_region
      %467 = dma.done [#allocation5], 128
    $region37: #{tpu_custom_call.1} parent=1 // pred_fallthru
      _
    // Predicated region
    $region38: #{tpu_custom_call.1} parent=1 // pred_check
      _
    $region39: #{tpu_custom_call.1} parent=1 // pred_check_branch
      %469 = sbr.rel (0) target = $region41
    $region40: #{tpu_custom_call.1} parent=1 // pred_region
      %470 = dma.done [#allocation5], 128
    $region41: #{tpu_custom_call.1} parent=1 // pred_fallthru
      _
    %471 = vsyncpa [#allocation3], 1
    %472 = vsyncpa [#allocation5], 1

</llo_original>
